<compile_context>
chip_gen: v7x
topology: tpu7x:2x2x1
jax: 0.10.0
libtpu: 0.0.40
codegen_flags: <defaults>
</compile_context>

<pallas_src>
import jax
import jax.numpy as jnp
from jax.experimental import pallas as pl

SIZE = 20     # input_size == hidden_size == 20
SUBL = 8      # sublane padding of the batch dim
KPAD = 32     # lane padding of the hidden/input feature (contraction) dims
LANES = 128   # packed gate block width (one vreg of lanes)
# Gate lane offsets inside the single 128-lane block.  PyTorch gate order is
# (r, z, n); we place n first so h shares the n-gate lane block.
OFF_N, OFF_R, OFF_Z = 0, 32, 64


def gru_layer_kernel(x_ref, h0_ref, wih_ref, whh_ref, bgi_ref, bhn_ref,
                     wl_ref, bl_ref, out_ref, hn_ref):
    TB = x_ref.shape[0]
    B8 = h0_ref.shape[0]          # sublane-padded batch (8)
    KH = h0_ref.shape[1]          # lane-padded hidden width (32)
    P = whh_ref.shape[1]          # packed gate block width (128)
    T = TB // B8

    # Hoisted input projection for all timesteps at once.  Biases
    # b_ih (all gates) + b_hh (r, z) are folded in; gate g of (t, b) lives at
    # gi[t*B8 + b, OFF_g : OFF_g + H].
    gi = jnp.dot(x_ref[...], wih_ref[...],
                 preferred_element_type=jnp.float32) + bgi_ref[...]

    whh = whh_ref[...]                                  # (KH, P)
    bhn = jnp.broadcast_to(bhn_ref[...], (B8, P))       # b_hh_n at n lanes, hoisted
    h = h0_ref[...]                                     # (B8, KH), n-gate-aligned lanes

    # Fully-unrolled serial recurrence (T is small & static).  Only the single
    # 1-result-tile hidden->hidden matmul sits on the serial MXU path per step.
    # TODO(synk): on v5e, pin W_hh in the MXU weight registers across the loop
    #             via pltpu.matmul_push_rhs / matmul_acc_lhs / matmul_pop.
    # TODO(synk): if T grows beyond ~32, switch to lax.fori_loop with gi staged
    #             in a VMEM scratch to bound vreg live ranges.
    hs = []
    for t in range(T):
        gi_t = gi[t * B8:(t + 1) * B8, :]               # (8,128), (8,128)-tile aligned
        gh = jnp.dot(h, whh, preferred_element_type=jnp.float32) + bhn  # (8,128)
        # One sigmoid handles both r and z (they share the 128-lane block).
        s = jax.nn.sigmoid(gi_t + gh)
        r = s[:, OFF_R:OFF_R + KH]                      # (8,32)
        z = s[:, OFF_Z:OFF_Z + KH]                      # (8,32)
        # n-gate lanes of gh already include b_hh_n (bhn is zero elsewhere).
        n = jnp.tanh(gi_t[:, OFF_N:OFF_N + KH] + r * gh[:, OFF_N:OFF_N + KH])
        h = n + z * (h - n)                             # == (1-z)*n + z*h
        hs.append(h)

    # Hoisted output Linear over the stacked hidden states; single lane-dense
    # (T*8, 128) bulk write.
    h_all = jnp.concatenate(hs, axis=0)                 # (T*8, 32), ~T vregs
    y = jnp.dot(h_all, wl_ref[...],
                preferred_element_type=jnp.float32) + bl_ref[...]
    out_ref[...] = y
    hn_ref[...] = h


def pack_params(params, H=SIZE, KP=KPAD, P=LANES):
    """Pack weights: all gates share one 128-lane block at offsets 0/32/64."""
    wih = params["weight_ih"]    # (3H, D)  row blocks: [r; z; n]
    whh = params["weight_hh"]    # (3H, H)
    bih = params["bias_ih"]      # (3H,)
    bhh = params["bias_hh"]      # (3H,)
    wl = params["weight_lin"]    # (H, H)
    bl = params["bias_lin"]      # (H,)
    D = wih.shape[1]

    wih_p = jnp.zeros((KP, P), jnp.float32)
    wih_p = wih_p.at[:D, OFF_N:OFF_N + H].set(wih[2 * H:3 * H, :].T)
    wih_p = wih_p.at[:D, OFF_R:OFF_R + H].set(wih[0:H, :].T)
    wih_p = wih_p.at[:D, OFF_Z:OFF_Z + H].set(wih[H:2 * H, :].T)

    whh_p = jnp.zeros((KP, P), jnp.float32)
    whh_p = whh_p.at[:H, OFF_N:OFF_N + H].set(whh[2 * H:3 * H, :].T)
    whh_p = whh_p.at[:H, OFF_R:OFF_R + H].set(whh[0:H, :].T)
    whh_p = whh_p.at[:H, OFF_Z:OFF_Z + H].set(whh[H:2 * H, :].T)

    # Fold b_ih (all gates) + b_hh (r, z) into the hoisted input projection;
    # keep b_hh_n separate (it is multiplied by r inside the loop).
    bgi_p = jnp.zeros((1, P), jnp.float32)
    bgi_p = bgi_p.at[0, OFF_N:OFF_N + H].set(bih[2 * H:3 * H])
    bgi_p = bgi_p.at[0, OFF_R:OFF_R + H].set(bih[0:H] + bhh[0:H])
    bgi_p = bgi_p.at[0, OFF_Z:OFF_Z + H].set(bih[H:2 * H] + bhh[H:2 * H])
    bhn_p = jnp.zeros((1, P), jnp.float32).at[0, OFF_N:OFF_N + H].set(bhh[2 * H:3 * H])

    wl_p = jnp.zeros((KP, P), jnp.float32).at[:H, :H].set(wl.T)
    bl_p = jnp.zeros((1, P), jnp.float32).at[0, :H].set(bl)
    return wih_p, whh_p, bgi_p, bhn_p, wl_p, bl_p


def gru_layer_forward(x, h0, params):
    """x: (T, B, D) float32, h0: (1, B, H) float32 -> (out (T,B,H), hn (1,B,H))."""
    T, B, D = x.shape
    H = h0.shape[-1]
    assert D <= KPAD and H <= KPAD
    B8 = ((B + SUBL - 1) // SUBL) * SUBL

    wih_p, whh_p, bgi_p, bhn_p, wl_p, bl_p = pack_params(params, H)

    # Pad batch to a multiple of 8 sublanes and features to 32 lanes so every
    # per-step access in the kernel is (8,128)-tile aligned.
    x_p = jnp.zeros((T, B8, KPAD), jnp.float32).at[:, :B, :D].set(x)
    x2 = x_p.reshape(T * B8, KPAD)
    h0_p = jnp.zeros((B8, KPAD), jnp.float32).at[:B, :H].set(h0[0])

    # Single invocation; everything fits in VMEM, no grid pipelining.
    # TODO(synk): for large B on v7x, add a "parallel" batch grid axis so the
    #             second TensorCore is used (keep T serial inside the kernel).
    y_pad, hn_pad = pl.pallas_call(
        gru_layer_kernel,
        out_shape=(
            jax.ShapeDtypeStruct((T * B8, LANES), jnp.float32),   # Linear out, padded
            jax.ShapeDtypeStruct((B8, KPAD), jnp.float32),        # h_T, padded
        ),
    )(x2, h0_p, wih_p, whh_p, bgi_p, bhn_p, wl_p, bl_p)

    out = y_pad.reshape(T, B8, LANES)[:, :B, :H]
    hn = hn_pad[:B, :H][None]
    return out, hn


def init_params(key, size=SIZE):
    # Deterministic init mimicking PyTorch's U(-1/sqrt(H), 1/sqrt(H)).
    ks = jax.random.split(key, 6)
    stdv = 1.0 / jnp.sqrt(jnp.float32(size))
    u = lambda k, shape: jax.random.uniform(k, shape, jnp.float32, -stdv, stdv)
    return {
        "weight_ih": u(ks[0], (3 * size, size)),
        "weight_hh": u(ks[1], (3 * size, size)),
        "bias_ih": u(ks[2], (3 * size,)),
        "bias_hh": u(ks[3], (3 * size,)),
        "weight_lin": u(ks[4], (size, size)),
        "bias_lin": u(ks[5], (size,)),
    }


def reference_forward(x, h0, p):
    # Pure-JAX reference of nn.GRU + nn.Linear for correctness checking.
    H = h0.shape[-1]

    def step(h, x_t):
        gi = x_t @ p["weight_ih"].T + p["bias_ih"]
        gh = h @ p["weight_hh"].T + p["bias_hh"]
        i_r, i_z, i_n = gi[:, :H], gi[:, H:2 * H], gi[:, 2 * H:]
        h_r, h_z, h_n = gh[:, :H], gh[:, H:2 * H], gh[:, 2 * H:]
        r = jax.nn.sigmoid(i_r + h_r)
        z = jax.nn.sigmoid(i_z + h_z)
        n = jnp.tanh(i_n + r * h_n)
        h_new = (1 - z) * n + z * h
        return h_new, h_new

    h_last, hs = jax.lax.scan(step, h0[0], x)
    out = hs @ p["weight_lin"].T + p["bias_lin"]
    return out, h_last[None]


if __name__ == "__main__":
    key = jax.random.PRNGKey(0)
    k_x, k_h, k_p = jax.random.split(key, 3)

    T, B = 8, 2
    x = jax.random.normal(k_x, (T, B, SIZE), jnp.float32)
    h0 = jax.random.normal(k_h, (1, B, SIZE), jnp.float32)
    params = init_params(k_p)

    out, hn = gru_layer_forward(x, h0, params)
    out = jax.block_until_ready(out)
    hn = jax.block_until_ready(hn)

    ref_out, ref_hn = reference_forward(x, h0, params)
    assert jnp.allclose(out, ref_out, atol=2e-5, rtol=2e-5)
    assert jnp.allclose(hn, ref_hn, atol=2e-5, rtol=2e-5)
    print("KERNEL_OK")
</pallas_src>

<mosaic_0001>
module attributes {stable_mosaic.version = 11 : i64} {
  func.func @gru_layer_kernel(%arg0: memref<64x32xf32, #tpu.memory_space<vmem>>, %arg1: memref<8x32xf32, #tpu.memory_space<vmem>>, %arg2: memref<32x128xf32, #tpu.memory_space<vmem>>, %arg3: memref<32x128xf32, #tpu.memory_space<vmem>>, %arg4: memref<1x128xf32, #tpu.memory_space<vmem>>, %arg5: memref<1x128xf32, #tpu.memory_space<vmem>>, %arg6: memref<32x128xf32, #tpu.memory_space<vmem>>, %arg7: memref<1x128xf32, #tpu.memory_space<vmem>>, %arg8: memref<64x128xf32, #tpu.memory_space<vmem>>, %arg9: memref<8x32xf32, #tpu.memory_space<vmem>>) attributes {dimension_semantics = [], scalar_prefetch = 0 : i64, scratch_operands = 0 : i64, tpu.core_type = #tpu.core_type<tc>} {
    %c0 = arith.constant 0 : index
    %c0_0 = arith.constant 0 : index
    %0 = vector.load %arg0[%c0, %c0_0] : memref<64x32xf32, #tpu.memory_space<vmem>>, vector<64x32xf32>
    %c0_1 = arith.constant 0 : index
    %c0_2 = arith.constant 0 : index
    %1 = vector.load %arg2[%c0_1, %c0_2] : memref<32x128xf32, #tpu.memory_space<vmem>>, vector<32x128xf32>
    %cst = arith.constant dense<0.000000e+00> : vector<64x128xf32>
    %2 = tpu.matmul %0, %1, %cst {dimension_numbers = #tpu.dot_dimension_numbers<[1], [0], [0], [1], [0, 0, 1, 1], [], []>} : vector<64x32xf32>, vector<32x128xf32>, vector<64x128xf32> -> vector<64x128xf32>
    %c0_3 = arith.constant 0 : index
    %c0_4 = arith.constant 0 : index
    %3 = vector.load %arg4[%c0_3, %c0_4] : memref<1x128xf32, #tpu.memory_space<vmem>>, vector<1x128xf32>
    %4 = vector.broadcast %3 : vector<1x128xf32> to vector<64x128xf32>
    %5 = arith.addf %2, %4 : vector<64x128xf32>
    %c0_5 = arith.constant 0 : index
    %c0_6 = arith.constant 0 : index
    %6 = vector.load %arg3[%c0_5, %c0_6] : memref<32x128xf32, #tpu.memory_space<vmem>>, vector<32x128xf32>
    %c0_7 = arith.constant 0 : index
    %c0_8 = arith.constant 0 : index
    %7 = vector.load %arg5[%c0_7, %c0_8] : memref<1x128xf32, #tpu.memory_space<vmem>>, vector<1x128xf32>
    %8 = vector.shape_cast %7 : vector<1x128xf32> to vector<1x128xf32>
    %9 = vector.broadcast %8 : vector<1x128xf32> to vector<8x128xf32>
    %c0_9 = arith.constant 0 : index
    %c0_10 = arith.constant 0 : index
    %10 = vector.load %arg1[%c0_9, %c0_10] : memref<8x32xf32, #tpu.memory_space<vmem>>, vector<8x32xf32>
    %11 = vector.extract_strided_slice %5 {offsets = [0, 0], sizes = [8, 128], strides = [1, 1]} : vector<64x128xf32> to vector<8x128xf32>
    %cst_11 = arith.constant dense<0.000000e+00> : vector<8x128xf32>
    %12 = tpu.matmul %10, %6, %cst_11 {dimension_numbers = #tpu.dot_dimension_numbers<[1], [0], [0], [1], [0, 0, 1, 1], [], []>} : vector<8x32xf32>, vector<32x128xf32>, vector<8x128xf32> -> vector<8x128xf32>
    %13 = arith.addf %12, %9 : vector<8x128xf32>
    %14 = arith.addf %11, %13 : vector<8x128xf32>
    %15 = arith.negf %14 : vector<8x128xf32>
    %16 = math.exp %15 : vector<8x128xf32>
    %cst_12 = arith.constant 1.000000e+00 : f32
    %17 = vector.broadcast %cst_12 : f32 to vector<8x128xf32>
    %18 = arith.addf %17, %16 : vector<8x128xf32>
    %19 = arith.divf %17, %18 : vector<8x128xf32>
    %20 = vector.extract_strided_slice %19 {offsets = [0, 32], sizes = [8, 32], strides = [1, 1]} : vector<8x128xf32> to vector<8x32xf32>
    %21 = vector.extract_strided_slice %19 {offsets = [0, 64], sizes = [8, 32], strides = [1, 1]} : vector<8x128xf32> to vector<8x32xf32>
    %22 = vector.extract_strided_slice %11 {offsets = [0, 0], sizes = [8, 32], strides = [1, 1]} : vector<8x128xf32> to vector<8x32xf32>
    %23 = vector.extract_strided_slice %13 {offsets = [0, 0], sizes = [8, 32], strides = [1, 1]} : vector<8x128xf32> to vector<8x32xf32>
    %24 = arith.mulf %20, %23 : vector<8x32xf32>
    %25 = arith.addf %22, %24 : vector<8x32xf32>
    %26 = math.tanh %25 : vector<8x32xf32>
    %27 = arith.subf %10, %26 : vector<8x32xf32>
    %28 = arith.mulf %21, %27 : vector<8x32xf32>
    %29 = arith.addf %26, %28 : vector<8x32xf32>
    %30 = vector.extract_strided_slice %5 {offsets = [8, 0], sizes = [8, 128], strides = [1, 1]} : vector<64x128xf32> to vector<8x128xf32>
    %cst_13 = arith.constant dense<0.000000e+00> : vector<8x128xf32>
    %31 = tpu.matmul %29, %6, %cst_13 {dimension_numbers = #tpu.dot_dimension_numbers<[1], [0], [0], [1], [0, 0, 1, 1], [], []>} : vector<8x32xf32>, vector<32x128xf32>, vector<8x128xf32> -> vector<8x128xf32>
    %32 = arith.addf %31, %9 : vector<8x128xf32>
    %33 = arith.addf %30, %32 : vector<8x128xf32>
    %34 = arith.negf %33 : vector<8x128xf32>
    %35 = math.exp %34 : vector<8x128xf32>
    %cst_14 = arith.constant 1.000000e+00 : f32
    %36 = vector.broadcast %cst_14 : f32 to vector<8x128xf32>
    %37 = arith.addf %36, %35 : vector<8x128xf32>
    %38 = arith.divf %36, %37 : vector<8x128xf32>
    %39 = vector.extract_strided_slice %38 {offsets = [0, 32], sizes = [8, 32], strides = [1, 1]} : vector<8x128xf32> to vector<8x32xf32>
    %40 = vector.extract_strided_slice %38 {offsets = [0, 64], sizes = [8, 32], strides = [1, 1]} : vector<8x128xf32> to vector<8x32xf32>
    %41 = vector.extract_strided_slice %30 {offsets = [0, 0], sizes = [8, 32], strides = [1, 1]} : vector<8x128xf32> to vector<8x32xf32>
    %42 = vector.extract_strided_slice %32 {offsets = [0, 0], sizes = [8, 32], strides = [1, 1]} : vector<8x128xf32> to vector<8x32xf32>
    %43 = arith.mulf %39, %42 : vector<8x32xf32>
    %44 = arith.addf %41, %43 : vector<8x32xf32>
    %45 = math.tanh %44 : vector<8x32xf32>
    %46 = arith.subf %29, %45 : vector<8x32xf32>
    %47 = arith.mulf %40, %46 : vector<8x32xf32>
    %48 = arith.addf %45, %47 : vector<8x32xf32>
    %49 = vector.extract_strided_slice %5 {offsets = [16, 0], sizes = [8, 128], strides = [1, 1]} : vector<64x128xf32> to vector<8x128xf32>
    %cst_15 = arith.constant dense<0.000000e+00> : vector<8x128xf32>
    %50 = tpu.matmul %48, %6, %cst_15 {dimension_numbers = #tpu.dot_dimension_numbers<[1], [0], [0], [1], [0, 0, 1, 1], [], []>} : vector<8x32xf32>, vector<32x128xf32>, vector<8x128xf32> -> vector<8x128xf32>
    %51 = arith.addf %50, %9 : vector<8x128xf32>
    %52 = arith.addf %49, %51 : vector<8x128xf32>
    %53 = arith.negf %52 : vector<8x128xf32>
    %54 = math.exp %53 : vector<8x128xf32>
    %cst_16 = arith.constant 1.000000e+00 : f32
    %55 = vector.broadcast %cst_16 : f32 to vector<8x128xf32>
    %56 = arith.addf %55, %54 : vector<8x128xf32>
    %57 = arith.divf %55, %56 : vector<8x128xf32>
    %58 = vector.extract_strided_slice %57 {offsets = [0, 32], sizes = [8, 32], strides = [1, 1]} : vector<8x128xf32> to vector<8x32xf32>
    %59 = vector.extract_strided_slice %57 {offsets = [0, 64], sizes = [8, 32], strides = [1, 1]} : vector<8x128xf32> to vector<8x32xf32>
    %60 = vector.extract_strided_slice %49 {offsets = [0, 0], sizes = [8, 32], strides = [1, 1]} : vector<8x128xf32> to vector<8x32xf32>
    %61 = vector.extract_strided_slice %51 {offsets = [0, 0], sizes = [8, 32], strides = [1, 1]} : vector<8x128xf32> to vector<8x32xf32>
    %62 = arith.mulf %58, %61 : vector<8x32xf32>
    %63 = arith.addf %60, %62 : vector<8x32xf32>
    %64 = math.tanh %63 : vector<8x32xf32>
    %65 = arith.subf %48, %64 : vector<8x32xf32>
    %66 = arith.mulf %59, %65 : vector<8x32xf32>
    %67 = arith.addf %64, %66 : vector<8x32xf32>
    %68 = vector.extract_strided_slice %5 {offsets = [24, 0], sizes = [8, 128], strides = [1, 1]} : vector<64x128xf32> to vector<8x128xf32>
    %cst_17 = arith.constant dense<0.000000e+00> : vector<8x128xf32>
    %69 = tpu.matmul %67, %6, %cst_17 {dimension_numbers = #tpu.dot_dimension_numbers<[1], [0], [0], [1], [0, 0, 1, 1], [], []>} : vector<8x32xf32>, vector<32x128xf32>, vector<8x128xf32> -> vector<8x128xf32>
    %70 = arith.addf %69, %9 : vector<8x128xf32>
    %71 = arith.addf %68, %70 : vector<8x128xf32>
    %72 = arith.negf %71 : vector<8x128xf32>
    %73 = math.exp %72 : vector<8x128xf32>
    %cst_18 = arith.constant 1.000000e+00 : f32
    %74 = vector.broadcast %cst_18 : f32 to vector<8x128xf32>
    %75 = arith.addf %74, %73 : vector<8x128xf32>
    %76 = arith.divf %74, %75 : vector<8x128xf32>
    %77 = vector.extract_strided_slice %76 {offsets = [0, 32], sizes = [8, 32], strides = [1, 1]} : vector<8x128xf32> to vector<8x32xf32>
    %78 = vector.extract_strided_slice %76 {offsets = [0, 64], sizes = [8, 32], strides = [1, 1]} : vector<8x128xf32> to vector<8x32xf32>
    %79 = vector.extract_strided_slice %68 {offsets = [0, 0], sizes = [8, 32], strides = [1, 1]} : vector<8x128xf32> to vector<8x32xf32>
    %80 = vector.extract_strided_slice %70 {offsets = [0, 0], sizes = [8, 32], strides = [1, 1]} : vector<8x128xf32> to vector<8x32xf32>
    %81 = arith.mulf %77, %80 : vector<8x32xf32>
    %82 = arith.addf %79, %81 : vector<8x32xf32>
    %83 = math.tanh %82 : vector<8x32xf32>
    %84 = arith.subf %67, %83 : vector<8x32xf32>
    %85 = arith.mulf %78, %84 : vector<8x32xf32>
    %86 = arith.addf %83, %85 : vector<8x32xf32>
    %87 = vector.extract_strided_slice %5 {offsets = [32, 0], sizes = [8, 128], strides = [1, 1]} : vector<64x128xf32> to vector<8x128xf32>
    %cst_19 = arith.constant dense<0.000000e+00> : vector<8x128xf32>
    %88 = tpu.matmul %86, %6, %cst_19 {dimension_numbers = #tpu.dot_dimension_numbers<[1], [0], [0], [1], [0, 0, 1, 1], [], []>} : vector<8x32xf32>, vector<32x128xf32>, vector<8x128xf32> -> vector<8x128xf32>
    %89 = arith.addf %88, %9 : vector<8x128xf32>
    %90 = arith.addf %87, %89 : vector<8x128xf32>
    %91 = arith.negf %90 : vector<8x128xf32>
    %92 = math.exp %91 : vector<8x128xf32>
    %cst_20 = arith.constant 1.000000e+00 : f32
    %93 = vector.broadcast %cst_20 : f32 to vector<8x128xf32>
    %94 = arith.addf %93, %92 : vector<8x128xf32>
    %95 = arith.divf %93, %94 : vector<8x128xf32>
    %96 = vector.extract_strided_slice %95 {offsets = [0, 32], sizes = [8, 32], strides = [1, 1]} : vector<8x128xf32> to vector<8x32xf32>
    %97 = vector.extract_strided_slice %95 {offsets = [0, 64], sizes = [8, 32], strides = [1, 1]} : vector<8x128xf32> to vector<8x32xf32>
    %98 = vector.extract_strided_slice %87 {offsets = [0, 0], sizes = [8, 32], strides = [1, 1]} : vector<8x128xf32> to vector<8x32xf32>
    %99 = vector.extract_strided_slice %89 {offsets = [0, 0], sizes = [8, 32], strides = [1, 1]} : vector<8x128xf32> to vector<8x32xf32>
    %100 = arith.mulf %96, %99 : vector<8x32xf32>
    %101 = arith.addf %98, %100 : vector<8x32xf32>
    %102 = math.tanh %101 : vector<8x32xf32>
    %103 = arith.subf %86, %102 : vector<8x32xf32>
    %104 = arith.mulf %97, %103 : vector<8x32xf32>
    %105 = arith.addf %102, %104 : vector<8x32xf32>
    %106 = vector.extract_strided_slice %5 {offsets = [40, 0], sizes = [8, 128], strides = [1, 1]} : vector<64x128xf32> to vector<8x128xf32>
    %cst_21 = arith.constant dense<0.000000e+00> : vector<8x128xf32>
    %107 = tpu.matmul %105, %6, %cst_21 {dimension_numbers = #tpu.dot_dimension_numbers<[1], [0], [0], [1], [0, 0, 1, 1], [], []>} : vector<8x32xf32>, vector<32x128xf32>, vector<8x128xf32> -> vector<8x128xf32>
    %108 = arith.addf %107, %9 : vector<8x128xf32>
    %109 = arith.addf %106, %108 : vector<8x128xf32>
    %110 = arith.negf %109 : vector<8x128xf32>
    %111 = math.exp %110 : vector<8x128xf32>
    %cst_22 = arith.constant 1.000000e+00 : f32
    %112 = vector.broadcast %cst_22 : f32 to vector<8x128xf32>
    %113 = arith.addf %112, %111 : vector<8x128xf32>
    %114 = arith.divf %112, %113 : vector<8x128xf32>
    %115 = vector.extract_strided_slice %114 {offsets = [0, 32], sizes = [8, 32], strides = [1, 1]} : vector<8x128xf32> to vector<8x32xf32>
    %116 = vector.extract_strided_slice %114 {offsets = [0, 64], sizes = [8, 32], strides = [1, 1]} : vector<8x128xf32> to vector<8x32xf32>
    %117 = vector.extract_strided_slice %106 {offsets = [0, 0], sizes = [8, 32], strides = [1, 1]} : vector<8x128xf32> to vector<8x32xf32>
    %118 = vector.extract_strided_slice %108 {offsets = [0, 0], sizes = [8, 32], strides = [1, 1]} : vector<8x128xf32> to vector<8x32xf32>
    %119 = arith.mulf %115, %118 : vector<8x32xf32>
    %120 = arith.addf %117, %119 : vector<8x32xf32>
    %121 = math.tanh %120 : vector<8x32xf32>
    %122 = arith.subf %105, %121 : vector<8x32xf32>
    %123 = arith.mulf %116, %122 : vector<8x32xf32>
    %124 = arith.addf %121, %123 : vector<8x32xf32>
    %125 = vector.extract_strided_slice %5 {offsets = [48, 0], sizes = [8, 128], strides = [1, 1]} : vector<64x128xf32> to vector<8x128xf32>
    %cst_23 = arith.constant dense<0.000000e+00> : vector<8x128xf32>
    %126 = tpu.matmul %124, %6, %cst_23 {dimension_numbers = #tpu.dot_dimension_numbers<[1], [0], [0], [1], [0, 0, 1, 1], [], []>} : vector<8x32xf32>, vector<32x128xf32>, vector<8x128xf32> -> vector<8x128xf32>
    %127 = arith.addf %126, %9 : vector<8x128xf32>
    %128 = arith.addf %125, %127 : vector<8x128xf32>
    %129 = arith.negf %128 : vector<8x128xf32>
    %130 = math.exp %129 : vector<8x128xf32>
    %cst_24 = arith.constant 1.000000e+00 : f32
    %131 = vector.broadcast %cst_24 : f32 to vector<8x128xf32>
    %132 = arith.addf %131, %130 : vector<8x128xf32>
    %133 = arith.divf %131, %132 : vector<8x128xf32>
    %134 = vector.extract_strided_slice %133 {offsets = [0, 32], sizes = [8, 32], strides = [1, 1]} : vector<8x128xf32> to vector<8x32xf32>
    %135 = vector.extract_strided_slice %133 {offsets = [0, 64], sizes = [8, 32], strides = [1, 1]} : vector<8x128xf32> to vector<8x32xf32>
    %136 = vector.extract_strided_slice %125 {offsets = [0, 0], sizes = [8, 32], strides = [1, 1]} : vector<8x128xf32> to vector<8x32xf32>
    %137 = vector.extract_strided_slice %127 {offsets = [0, 0], sizes = [8, 32], strides = [1, 1]} : vector<8x128xf32> to vector<8x32xf32>
    %138 = arith.mulf %134, %137 : vector<8x32xf32>
    %139 = arith.addf %136, %138 : vector<8x32xf32>
    %140 = math.tanh %139 : vector<8x32xf32>
    %141 = arith.subf %124, %140 : vector<8x32xf32>
    %142 = arith.mulf %135, %141 : vector<8x32xf32>
    %143 = arith.addf %140, %142 : vector<8x32xf32>
    %144 = vector.extract_strided_slice %5 {offsets = [56, 0], sizes = [8, 128], strides = [1, 1]} : vector<64x128xf32> to vector<8x128xf32>
    %cst_25 = arith.constant dense<0.000000e+00> : vector<8x128xf32>
    %145 = tpu.matmul %143, %6, %cst_25 {dimension_numbers = #tpu.dot_dimension_numbers<[1], [0], [0], [1], [0, 0, 1, 1], [], []>} : vector<8x32xf32>, vector<32x128xf32>, vector<8x128xf32> -> vector<8x128xf32>
    %146 = arith.addf %145, %9 : vector<8x128xf32>
    %147 = arith.addf %144, %146 : vector<8x128xf32>
    %148 = arith.negf %147 : vector<8x128xf32>
    %149 = math.exp %148 : vector<8x128xf32>
    %cst_26 = arith.constant 1.000000e+00 : f32
    %150 = vector.broadcast %cst_26 : f32 to vector<8x128xf32>
    %151 = arith.addf %150, %149 : vector<8x128xf32>
    %152 = arith.divf %150, %151 : vector<8x128xf32>
    %153 = vector.extract_strided_slice %152 {offsets = [0, 32], sizes = [8, 32], strides = [1, 1]} : vector<8x128xf32> to vector<8x32xf32>
    %154 = vector.extract_strided_slice %152 {offsets = [0, 64], sizes = [8, 32], strides = [1, 1]} : vector<8x128xf32> to vector<8x32xf32>
    %155 = vector.extract_strided_slice %144 {offsets = [0, 0], sizes = [8, 32], strides = [1, 1]} : vector<8x128xf32> to vector<8x32xf32>
    %156 = vector.extract_strided_slice %146 {offsets = [0, 0], sizes = [8, 32], strides = [1, 1]} : vector<8x128xf32> to vector<8x32xf32>
    %157 = arith.mulf %153, %156 : vector<8x32xf32>
    %158 = arith.addf %155, %157 : vector<8x32xf32>
    %159 = math.tanh %158 : vector<8x32xf32>
    %160 = arith.subf %143, %159 : vector<8x32xf32>
    %161 = arith.mulf %154, %160 : vector<8x32xf32>
    %162 = arith.addf %159, %161 : vector<8x32xf32>
    %163 = tpu.concatenate %29, %48, %67, %86, %105, %124, %143, %162 in 0 : vector<8x32xf32>, vector<8x32xf32>, vector<8x32xf32>, vector<8x32xf32>, vector<8x32xf32>, vector<8x32xf32>, vector<8x32xf32>, vector<8x32xf32> -> vector<64x32xf32>
    %c0_27 = arith.constant 0 : index
    %c0_28 = arith.constant 0 : index
    %164 = vector.load %arg6[%c0_27, %c0_28] : memref<32x128xf32, #tpu.memory_space<vmem>>, vector<32x128xf32>
    %cst_29 = arith.constant dense<0.000000e+00> : vector<64x128xf32>
    %165 = tpu.matmul %163, %164, %cst_29 {dimension_numbers = #tpu.dot_dimension_numbers<[1], [0], [0], [1], [0, 0, 1, 1], [], []>} : vector<64x32xf32>, vector<32x128xf32>, vector<64x128xf32> -> vector<64x128xf32>
    %c0_30 = arith.constant 0 : index
    %c0_31 = arith.constant 0 : index
    %166 = vector.load %arg7[%c0_30, %c0_31] : memref<1x128xf32, #tpu.memory_space<vmem>>, vector<1x128xf32>
    %167 = vector.broadcast %166 : vector<1x128xf32> to vector<64x128xf32>
    %168 = arith.addf %165, %167 : vector<64x128xf32>
    %c0_32 = arith.constant 0 : index
    %c0_33 = arith.constant 0 : index
    %169 = vector.load %arg8[%c0_32, %c0_33] : memref<64x128xf32, #tpu.memory_space<vmem>>, vector<64x128xf32>
    tpu.vector_store %arg8[%c0_32, %c0_33], %168 {strides = array<i32>} : memref<64x128xf32, #tpu.memory_space<vmem>>, vector<64x128xf32>,
    %c0_34 = arith.constant 0 : index
    %c0_35 = arith.constant 0 : index
    %170 = vector.load %arg9[%c0_34, %c0_35] : memref<8x32xf32, #tpu.memory_space<vmem>>, vector<8x32xf32>
    tpu.vector_store %arg9[%c0_34, %c0_35], %162 {strides = array<i32>} : memref<8x32xf32, #tpu.memory_space<vmem>>, vector<8x32xf32>,
    return
  }
}

</mosaic_0001>

<llo_original>
// kernel: tpu_custom_call.1
$region0: #{tpu_custom_call.1}
  #allocation0 [shape = 'u32[]', space=smem, size = 0x4, offset = 0x4, fixed_abs, tag = 'smem constant byte address 0x4 - core index']
  #allocation1 [shape = 'u32[144,128]{1,0:T(1,128)}', space=vmem, size = 0x12000, scoped, tag = 'internal scratch']
  %s0 = inlined_call_operand.vmem [shape: f32[64,32], index: 0, kind: input, shape index: {}]
  %s1 = inlined_call_operand.hbm [shape: f32[8,32], index: 1, kind: input, shape index: {}]
  %s2 = inlined_call_operand.vmem [shape: f32[32,128], index: 2, kind: input, shape index: {}]
  %s3 = inlined_call_operand.vmem [shape: f32[32,128], index: 3, kind: input, shape index: {}]
  %s4 = inlined_call_operand.vmem [shape: f32[1,128], index: 4, kind: input, shape index: {}]
  %s5 = inlined_call_operand.vmem [shape: f32[1,128], index: 5, kind: input, shape index: {}]
  %s6 = inlined_call_operand.vmem [shape: f32[32,128], index: 6, kind: input, shape index: {}]
  %s7 = inlined_call_operand.vmem [shape: f32[1,128], index: 7, kind: input, shape index: {}]
  %s8 = inlined_call_operand.hbm [shape: f32[64,128], index: 8, kind: output, shape index: {0}]
  %s9 = inlined_call_operand.hbm [shape: f32[8,32], index: 9, kind: output, shape index: {1}]
  %10 = xla_tuple %s8, %s9
  %s11 = sld [smem:[#allocation0]]
  $region54: #{tpu_custom_call.1} parent=0
    _
  %s13 = ssub.s32 1, %s11
  %s14 = scalar_select 0, %s13, %s11
  $region1: #{tpu_custom_call.1} parent=0
    #allocation2 [shape = 'u8[4096]{0}', space=vmem, size = 0x1000, scoped, tag = 'input window, operand 1, single buffered']
    #allocation3 [shape = 's32[1]{0}', space=sflag, size = 0x4, scoped, tag = 'scoped memory for tpu_custom_call.1']
    #allocation4 [shape = 's32[1]{0}', space=sflag, size = 0x4, scoped, tag = 'scoped memory for tpu_custom_call.1']
    #allocation5 [shape = 'u8[32768]{0}', space=vmem, size = 0x8000, scoped, tag = 'output window, operand 0, single buffered']
    #allocation6 [shape = 'u8[4096]{0}', space=vmem, size = 0x1000, scoped, tag = 'output window, operand 1, single buffered']
    #allocation7 [shape = 's32[1]{0}', space=sflag, size = 0x4, scoped, tag = 'scoped memory for tpu_custom_call.1']
    %15 = vsyncpa [#allocation3], 0
    %16 = vsyncpa [#allocation4], 0
    %17 = vsyncpa [#allocation7], 0
    // Predicated region
    $region2: #{tpu_custom_call.1} parent=1 // pred_check
      _
    $region3: #{tpu_custom_call.1} parent=1 // pred_check_branch
      %19 = sbr.rel (0) target = $region5
    $region4: #{tpu_custom_call.1} parent=1 // pred_region
      _
    $region5: #{tpu_custom_call.1} parent=1 // pred_fallthru
      _
    // Predicated region
    $region6: #{tpu_custom_call.1} parent=1 // pred_check
      _
    $region7: #{tpu_custom_call.1} parent=1 // pred_check_branch
      %21 = sbr.rel (0) target = $region9
    $region8: #{tpu_custom_call.1} parent=1 // pred_region
      %s23 = ssub.s32 128, 128
      %24 = vsyncadd [#allocation3], %s23
      %s26 = sshll.u32 [#allocation2], 4
      %s27 = int_to_ptr.vmem [resolvable:$true] %s26
      %29 = dma.hbm_to_vmem [thread:$0]  %s1, 128, %s27, [#allocation3]
    $region9: #{tpu_custom_call.1} parent=1 // pred_fallthru
      _
    // Predicated region
    $region10: #{tpu_custom_call.1} parent=1 // pred_check
      _
    $region11: #{tpu_custom_call.1} parent=1 // pred_check_branch
      %31 = sbr.rel (0) target = $region13
    $region12: #{tpu_custom_call.1} parent=1 // pred_region
      _
    $region13: #{tpu_custom_call.1} parent=1 // pred_fallthru
      _
    // Predicated region
    $region14: #{tpu_custom_call.1} parent=1 // pred_check
      _
    $region15: #{tpu_custom_call.1} parent=1 // pred_check_branch
      %33 = sbr.rel (0) target = $region17
    $region16: #{tpu_custom_call.1} parent=1 // pred_region
      _
    $region17: #{tpu_custom_call.1} parent=1 // pred_fallthru
      _
    // Predicated region
    $region18: #{tpu_custom_call.1} parent=1 // pred_check
      _
    $region19: #{tpu_custom_call.1} parent=1 // pred_check_branch
      %35 = sbr.rel (0) target = $region21
    $region20: #{tpu_custom_call.1} parent=1 // pred_region
      _
    $region21: #{tpu_custom_call.1} parent=1 // pred_fallthru
      _
    // Predicated region
    $region22: #{tpu_custom_call.1} parent=1 // pred_check
      _
    $region23: #{tpu_custom_call.1} parent=1 // pred_check_branch
      %37 = sbr.rel (0) target = $region25
    $region24: #{tpu_custom_call.1} parent=1 // pred_region
      _
    $region25: #{tpu_custom_call.1} parent=1 // pred_fallthru
      _
    // Predicated region
    $region26: #{tpu_custom_call.1} parent=1 // pred_check
      _
    $region27: #{tpu_custom_call.1} parent=1 // pred_check_branch
      %39 = sbr.rel (0) target = $region29
    $region28: #{tpu_custom_call.1} parent=1 // pred_region
      _
    $region29: #{tpu_custom_call.1} parent=1 // pred_fallthru
      _
    // Predicated region
    $region30: #{tpu_custom_call.1} parent=1 // pred_check
      _
    $region31: #{tpu_custom_call.1} parent=1 // pred_check_branch
      %41 = sbr.rel (0) target = $region33
    $region32: #{tpu_custom_call.1} parent=1 // pred_region
      _
    $region33: #{tpu_custom_call.1} parent=1 // pred_fallthru
      _
    // Predicated region
    $region34: #{tpu_custom_call.1} parent=1 // pred_check
      _
    $region35: #{tpu_custom_call.1} parent=1 // pred_check_branch
      %43 = sbr.rel (0) target = $region37
    $region36: #{tpu_custom_call.1} parent=1 // pred_region
      %44 = dma.done [#allocation3], 128
    $region37: #{tpu_custom_call.1} parent=1 // pred_fallthru
      _
    %v45 = vld [vmem:[%s0] sm:$0xff]
    %v46 = vld [vmem:[%s0 + $0x8] sm:$0xff]
    %v47 = vld [vmem:[%s0 + $0x10] sm:$0xff]
    %v48 = vld [vmem:[%s0 + $0x18] sm:$0xff]
    %v49 = vld [vmem:[%s0 + $0x20] sm:$0xff]
    %v50 = vld [vmem:[%s0 + $0x28] sm:$0xff]
    %v51 = vld [vmem:[%s0 + $0x30] sm:$0xff]
    %v52 = vld [vmem:[%s0 + $0x38] sm:$0xff]
    %v53 = vld [vmem:[%s2] sm:$0xff]
    %v54 = vld [vmem:[%s2 + $0x8] sm:$0xff]
    %v55 = vld [vmem:[%s2 + $0x10] sm:$0xff]
    %v56 = vld [vmem:[%s2 + $0x18] sm:$0xff]
    %v57 = vld [vmem:[%s4] sm:$0x1]
    %v59 = vlaneseq
    %v60 = vshrl.u32 %v59, 7
    %v61 = vsub.s32 0, %v60
    %v62 = vrot.slane %v57, %v61
    %vm64 = vcmask 261120
    %v66 = vsel %vm64, %v45, 0
    %v69 = vsel %vm64, %v46, 0
    %v72 = vsel %vm64, %v47, 0
    %v75 = vsel %vm64, %v48, 0
    %v78 = vsel %vm64, %v49, 0
    %v81 = vsel %vm64, %v50, 0
    %v84 = vsel %vm64, %v51, 0
    %v87 = vsel %vm64, %v52, 0
    %89 = vmatprep.subr.mxu0 0.0
    %90 = vmatpush1.msra.mxu0 %v53
    %91 = vmatprep.subr.mxu0 0.0
    %92 = vmatpush1.msra.mxu0 %v54
    %93 = vmatprep.subr.mxu0 0.0
    %94 = vmatpush1.msra.mxu0 %v55
    %95 = vmatprep.subr.mxu0 0.0
    %96 = vmatpush1.msra.mxu0 %v56
    %97 = vmatprep.subr.mxu0 0.0
    %98 = vmatpush1.msra.mxu0 0.0
    %99 = vmatprep.subr.mxu0 0.0
    %100 = vmatpush1.msra.mxu0 0.0
    %101 = vmatprep.subr.mxu0 0.0
    %102 = vmatpush1.msra.mxu0 0.0
    %103 = vmatprep.subr.mxu0 0.0
    %104 = vmatpush1.msra.mxu0 0.0
    %105 = vmatprep.subr.mxu0 0.0
    %106 = vmatpush1.msra.mxu0 0.0
    %107 = vmatprep.subr.mxu0 0.0
    %108 = vmatpush1.msra.mxu0 0.0
    %109 = vmatprep.subr.mxu0 0.0
    %110 = vmatpush1.msra.mxu0 0.0
    %111 = vmatprep.subr.mxu0 0.0
    %112 = vmatpush1.msra.mxu0 0.0
    %113 = vmatprep.subr.mxu0 0.0
    %114 = vmatpush1.msra.mxu0 0.0
    %115 = vmatprep.subr.mxu0 0.0
    %116 = vmatpush1.msra.mxu0 0.0
    %117 = vmatprep.subr.mxu0 0.0
    %118 = vmatpush1.msra.mxu0 0.0
    %119 = vmatprep.subr.mxu0 0.0
    %120 = vmatpush1.msra.mxu0 0.0
    %121 = vmatprep.subr.mxu0 0.0
    %122 = vmatpush1.msra.mxu0 0.0
    %123 = vmatprep.subr.mxu0 0.0
    %124 = vmatpush1.msra.mxu0 0.0
    %125 = vmatprep.subr.mxu0 0.0
    %126 = vmatpush1.msra.mxu0 0.0
    %127 = vmatprep.subr.mxu0 0.0
    %128 = vmatpush1.msra.mxu0 0.0
    %129 = vmatprep.subr.mxu0 0.0
    %130 = vmatpush1.msra.mxu0 0.0
    %131 = vmatprep.subr.mxu0 0.0
    %132 = vmatpush1.msra.mxu0 0.0
    %133 = vmatprep.subr.mxu0 0.0
    %134 = vmatpush1.msra.mxu0 0.0
    %135 = vmatprep.subr.mxu0 0.0
    %136 = vmatpush1.msra.mxu0 0.0
    %137 = vmatprep.subr.mxu0 0.0
    %138 = vmatpush1.msra.mxu0 0.0
    %139 = vmatprep.subr.mxu0 0.0
    %140 = vmatpush1.msra.mxu0 0.0
    %141 = vmatprep.subr.mxu0 0.0
    %142 = vmatpush1.msra.mxu0 0.0
    %143 = vmatprep.subr.mxu0 0.0
    %144 = vmatpush1.msra.mxu0 0.0
    %145 = vmatprep.subr.mxu0 0.0
    %146 = vmatpush1.msra.mxu0 0.0
    %147 = vmatprep.subr.mxu0 0.0
    %148 = vmatpush1.msra.mxu0 0.0
    %149 = vmatprep.subr.mxu0 0.0
    %150 = vmatpush1.msra.mxu0 0.0
    %151 = vmatprep.subr.mxu0 0.0
    %152 = vmatpush1.msra.mxu0 0.0
    %153 = vmatprep.mubr.f32.mxu0 0.0
    %154 = vmatmul.mubr.f32.gmra.mrb[0].mxu0 %v66
    %v155 = vpop.f32.mrb[0].mxu0
    %v156 = vadd.f32 %v62, %v155
    %v157 = vpop.f32.mrb[0].mxu0
    %158 = vmatprep.mubr.f32.mxu0 0.0
    %159 = vmatmul.mubr.f32.gmra.mrb[0].mxu0 %v69
    %v160 = vpop.f32.mrb[0].mxu0
    %v161 = vadd.f32 %v62, %v160
    %v162 = vpop.f32.mrb[0].mxu0
    %163 = vmatprep.mubr.f32.mxu0 0.0
    %164 = vmatmul.mubr.f32.gmra.mrb[0].mxu0 %v72
    %v165 = vpop.f32.mrb[0].mxu0
    %v166 = vadd.f32 %v62, %v165
    %v167 = vpop.f32.mrb[0].mxu0
    %168 = vmatprep.mubr.f32.mxu0 0.0
    %169 = vmatmul.mubr.f32.gmra.mrb[0].mxu0 %v75
    %v170 = vpop.f32.mrb[0].mxu0
    %v171 = vadd.f32 %v62, %v170
    %v172 = vpop.f32.mrb[0].mxu0
    %173 = vmatprep.mubr.f32.mxu0 0.0
    %174 = vmatmul.mubr.f32.gmra.mrb[0].mxu0 %v78
    %v175 = vpop.f32.mrb[0].mxu0
    %v176 = vadd.f32 %v62, %v175
    %v177 = vpop.f32.mrb[0].mxu0
    %178 = vmatprep.mubr.f32.mxu0 0.0
    %179 = vmatmul.mubr.f32.gmra.mrb[0].mxu0 %v81
    %v180 = vpop.f32.mrb[0].mxu0
    %v181 = vadd.f32 %v62, %v180
    %v182 = vpop.f32.mrb[0].mxu0
    %183 = vmatprep.mubr.f32.mxu0 0.0
    %184 = vmatmul.mubr.f32.gmra.mrb[0].mxu0 %v84
    %v185 = vpop.f32.mrb[0].mxu0
    %v186 = vadd.f32 %v62, %v185
    %v187 = vpop.f32.mrb[0].mxu0
    %188 = vmatprep.mubr.f32.mxu0 0.0
    %189 = vmatmul.mubr.f32.gmra.mrb[0].mxu0 %v87
    %v190 = vpop.f32.mrb[0].mxu0
    %v191 = vadd.f32 %v62, %v190
    %v192 = vpop.f32.mrb[0].mxu0
    %193 = vdwg.mxu0
    %v194 = vld [vmem:[%s3] sm:$0xff]
    %v195 = vld [vmem:[%s3 + $0x8] sm:$0xff]
    %v196 = vld [vmem:[%s3 + $0x10] sm:$0xff]
    %v197 = vld [vmem:[%s3 + $0x18] sm:$0xff]
    %v198 = vld [vmem:[%s5] sm:$0x1]
    %v200 = vlaneseq
    %v201 = vshrl.u32 %v200, 7
    %v202 = vsub.s32 0, %v201
    %v203 = vrot.slane %v198, %v202
    %v205 = vld [vmem:[#allocation2] sm:$0xff]
    %v207 = vsel %vm64, %v205, 0
    %209 = vmatprep.subr.mxu0 0.0
    %210 = vmatpush1.msra.mxu0 %v194
    %211 = vmatprep.subr.mxu0 0.0
    %212 = vmatpush1.msra.mxu0 %v195
    %213 = vmatprep.subr.mxu0 0.0
    %214 = vmatpush1.msra.mxu0 %v196
    %215 = vmatprep.subr.mxu0 0.0
    %216 = vmatpush1.msra.mxu0 %v197
    %217 = vmatprep.subr.mxu0 0.0
    %218 = vmatpush1.msra.mxu0 0.0
    %219 = vmatprep.subr.mxu0 0.0
    %220 = vmatpush1.msra.mxu0 0.0
    %221 = vmatprep.subr.mxu0 0.0
    %222 = vmatpush1.msra.mxu0 0.0
    %223 = vmatprep.subr.mxu0 0.0
    %224 = vmatpush1.msra.mxu0 0.0
    %225 = vmatprep.subr.mxu0 0.0
    %226 = vmatpush1.msra.mxu0 0.0
    %227 = vmatprep.subr.mxu0 0.0
    %228 = vmatpush1.msra.mxu0 0.0
    %229 = vmatprep.subr.mxu0 0.0
    %230 = vmatpush1.msra.mxu0 0.0
    %231 = vmatprep.subr.mxu0 0.0
    %232 = vmatpush1.msra.mxu0 0.0
    %233 = vmatprep.subr.mxu0 0.0
    %234 = vmatpush1.msra.mxu0 0.0
    %235 = vmatprep.subr.mxu0 0.0
    %236 = vmatpush1.msra.mxu0 0.0
    %237 = vmatprep.subr.mxu0 0.0
    %238 = vmatpush1.msra.mxu0 0.0
    %239 = vmatprep.subr.mxu0 0.0
    %240 = vmatpush1.msra.mxu0 0.0
    %241 = vmatprep.subr.mxu0 0.0
    %242 = vmatpush1.msra.mxu0 0.0
    %243 = vmatprep.subr.mxu0 0.0
    %244 = vmatpush1.msra.mxu0 0.0
    %245 = vmatprep.subr.mxu0 0.0
    %246 = vmatpush1.msra.mxu0 0.0
    %247 = vmatprep.subr.mxu0 0.0
    %248 = vmatpush1.msra.mxu0 0.0
    %249 = vmatprep.subr.mxu0 0.0
    %250 = vmatpush1.msra.mxu0 0.0
    %251 = vmatprep.subr.mxu0 0.0
    %252 = vmatpush1.msra.mxu0 0.0
    %253 = vmatprep.subr.mxu0 0.0
    %254 = vmatpush1.msra.mxu0 0.0
    %255 = vmatprep.subr.mxu0 0.0
    %256 = vmatpush1.msra.mxu0 0.0
    %257 = vmatprep.subr.mxu0 0.0
    %258 = vmatpush1.msra.mxu0 0.0
    %259 = vmatprep.subr.mxu0 0.0
    %260 = vmatpush1.msra.mxu0 0.0
    %261 = vmatprep.subr.mxu0 0.0
    %262 = vmatpush1.msra.mxu0 0.0
    %263 = vmatprep.subr.mxu0 0.0
    %264 = vmatpush1.msra.mxu0 0.0
    %265 = vmatprep.subr.mxu0 0.0
    %266 = vmatpush1.msra.mxu0 0.0
    %267 = vmatprep.subr.mxu0 0.0
    %268 = vmatpush1.msra.mxu0 0.0
    %269 = vmatprep.subr.mxu0 0.0
    %270 = vmatpush1.msra.mxu0 0.0
    %271 = vmatprep.subr.mxu0 0.0
    %272 = vmatpush1.msra.mxu0 0.0
    %273 = vmatprep.mubr.f32.mxu0 0.0
    %274 = vmatmul.mubr.f32.gmra.mrb[0].mxu0 %v207
    %v275 = vpop.f32.mrb[0].mxu0
    %v276 = vadd.f32 %v203, %v275
    %v277 = vpop.f32.mrb[0].mxu0
    %278 = vdwg.mxu0
    %v279 = vadd.f32 %v156, %v276
    %v280 = vxor.u32 %v279, 2147483648
    %v281 = vmul.f32 %v280, 1.442695
    %v282 = vpow.pop %v281
    %v283 = vadd.f32 %v282, 1.0
    %v284 = vrcp.pop %v283
    %v285 = vmul.f32 1.0, %v284
    %287 = vrot.lane.b32.xlu0 %v276, 32
    %v288 = vpop.permute.xlu0 %287
    %v290 = vmul.f32 %v285, %v288
    %292 = vrot.lane.b32.xlu0 %v290, 96
    %v293 = vpop.permute.xlu0 %292
    %v295 = vadd.f32 %v156, %v293
    %v296 = vtanh.pop %v295
    %v297 = vsub.f32 %v205, %v296
    %299 = vrot.lane.b32.xlu0 %v297, 64
    %v300 = vpop.permute.xlu0 %299
    %v302 = vmul.f32 %v285, %v300
    %304 = vrot.lane.b32.xlu0 %v302, 64
    %v305 = vpop.permute.xlu0 %304
    %v307 = vadd.f32 %v296, %v305
    %v309 = vsel %vm64, %v307, 0
    %311 = vmatprep.subr.mxu0 0.0
    %312 = vmatpush1.msra.mxu0 %v194
    %313 = vmatprep.subr.mxu0 0.0
    %314 = vmatpush1.msra.mxu0 %v195
    %315 = vmatprep.subr.mxu0 0.0
    %316 = vmatpush1.msra.mxu0 %v196
    %317 = vmatprep.subr.mxu0 0.0
    %318 = vmatpush1.msra.mxu0 %v197
    %319 = vmatprep.subr.mxu0 0.0
    %320 = vmatpush1.msra.mxu0 0.0
    %321 = vmatprep.subr.mxu0 0.0
    %322 = vmatpush1.msra.mxu0 0.0
    %323 = vmatprep.subr.mxu0 0.0
    %324 = vmatpush1.msra.mxu0 0.0
    %325 = vmatprep.subr.mxu0 0.0
    %326 = vmatpush1.msra.mxu0 0.0
    %327 = vmatprep.subr.mxu0 0.0
    %328 = vmatpush1.msra.mxu0 0.0
    %329 = vmatprep.subr.mxu0 0.0
    %330 = vmatpush1.msra.mxu0 0.0
    %331 = vmatprep.subr.mxu0 0.0
    %332 = vmatpush1.msra.mxu0 0.0
    %333 = vmatprep.subr.mxu0 0.0
    %334 = vmatpush1.msra.mxu0 0.0
    %335 = vmatprep.subr.mxu0 0.0
    %336 = vmatpush1.msra.mxu0 0.0
    %337 = vmatprep.subr.mxu0 0.0
    %338 = vmatpush1.msra.mxu0 0.0
    %339 = vmatprep.subr.mxu0 0.0
    %340 = vmatpush1.msra.mxu0 0.0
    %341 = vmatprep.subr.mxu0 0.0
    %342 = vmatpush1.msra.mxu0 0.0
    %343 = vmatprep.subr.mxu0 0.0
    %344 = vmatpush1.msra.mxu0 0.0
    %345 = vmatprep.subr.mxu0 0.0
    %346 = vmatpush1.msra.mxu0 0.0
    %347 = vmatprep.subr.mxu0 0.0
    %348 = vmatpush1.msra.mxu0 0.0
    %349 = vmatprep.subr.mxu0 0.0
    %350 = vmatpush1.msra.mxu0 0.0
    %351 = vmatprep.subr.mxu0 0.0
    %352 = vmatpush1.msra.mxu0 0.0
    %353 = vmatprep.subr.mxu0 0.0
    %354 = vmatpush1.msra.mxu0 0.0
    %355 = vmatprep.subr.mxu0 0.0
    %356 = vmatpush1.msra.mxu0 0.0
    %357 = vmatprep.subr.mxu0 0.0
    %358 = vmatpush1.msra.mxu0 0.0
    %359 = vmatprep.subr.mxu0 0.0
    %360 = vmatpush1.msra.mxu0 0.0
    %361 = vmatprep.subr.mxu0 0.0
    %362 = vmatpush1.msra.mxu0 0.0
    %363 = vmatprep.subr.mxu0 0.0
    %364 = vmatpush1.msra.mxu0 0.0
    %365 = vmatprep.subr.mxu0 0.0
    %366 = vmatpush1.msra.mxu0 0.0
    %367 = vmatprep.subr.mxu0 0.0
    %368 = vmatpush1.msra.mxu0 0.0
    %369 = vmatprep.subr.mxu0 0.0
    %370 = vmatpush1.msra.mxu0 0.0
    %371 = vmatprep.subr.mxu0 0.0
    %372 = vmatpush1.msra.mxu0 0.0
    %373 = vmatprep.subr.mxu0 0.0
    %374 = vmatpush1.msra.mxu0 0.0
    %375 = vmatprep.mubr.f32.mxu0 0.0
    %376 = vmatmul.mubr.f32.gmra.mrb[0].mxu0 %v309
    %v377 = vpop.f32.mrb[0].mxu0
    %v378 = vadd.f32 %v203, %v377
    %v379 = vpop.f32.mrb[0].mxu0
    %380 = vdwg.mxu0
    %v381 = vadd.f32 %v161, %v378
    %v382 = vxor.u32 %v381, 2147483648
    %v383 = vmul.f32 %v382, 1.442695
    %v384 = vpow.pop %v383
    %v385 = vadd.f32 %v384, 1.0
    %v386 = vrcp.pop %v385
    %v387 = vmul.f32 1.0, %v386
    %389 = vrot.lane.b32.xlu0 %v378, 32
    %v390 = vpop.permute.xlu0 %389
    %v392 = vmul.f32 %v387, %v390
    %394 = vrot.lane.b32.xlu0 %v392, 96
    %v395 = vpop.permute.xlu0 %394
    %v397 = vadd.f32 %v161, %v395
    %v398 = vtanh.pop %v397
    %v399 = vsub.f32 %v307, %v398
    %401 = vrot.lane.b32.xlu0 %v399, 64
    %v402 = vpop.permute.xlu0 %401
    %v404 = vmul.f32 %v387, %v402
    %406 = vrot.lane.b32.xlu0 %v404, 64
    %v407 = vpop.permute.xlu0 %406
    %v409 = vadd.f32 %v398, %v407
    %v411 = vsel %vm64, %v409, 0
    %413 = vmatprep.subr.mxu0 0.0
    %414 = vmatpush1.msra.mxu0 %v194
    %415 = vmatprep.subr.mxu0 0.0
    %416 = vmatpush1.msra.mxu0 %v195
    %417 = vmatprep.subr.mxu0 0.0
    %418 = vmatpush1.msra.mxu0 %v196
    %419 = vmatprep.subr.mxu0 0.0
    %420 = vmatpush1.msra.mxu0 %v197
    %421 = vmatprep.subr.mxu0 0.0
    %422 = vmatpush1.msra.mxu0 0.0
    %423 = vmatprep.subr.mxu0 0.0
    %424 = vmatpush1.msra.mxu0 0.0
    %425 = vmatprep.subr.mxu0 0.0
    %426 = vmatpush1.msra.mxu0 0.0
    %427 = vmatprep.subr.mxu0 0.0
    %428 = vmatpush1.msra.mxu0 0.0
    %429 = vmatprep.subr.mxu0 0.0
    %430 = vmatpush1.msra.mxu0 0.0
    %431 = vmatprep.subr.mxu0 0.0
    %432 = vmatpush1.msra.mxu0 0.0
    %433 = vmatprep.subr.mxu0 0.0
    %434 = vmatpush1.msra.mxu0 0.0
    %435 = vmatprep.subr.mxu0 0.0
    %436 = vmatpush1.msra.mxu0 0.0
    %437 = vmatprep.subr.mxu0 0.0
    %438 = vmatpush1.msra.mxu0 0.0
    %439 = vmatprep.subr.mxu0 0.0
    %440 = vmatpush1.msra.mxu0 0.0
    %441 = vmatprep.subr.mxu0 0.0
    %442 = vmatpush1.msra.mxu0 0.0
    %443 = vmatprep.subr.mxu0 0.0
    %444 = vmatpush1.msra.mxu0 0.0
    %445 = vmatprep.subr.mxu0 0.0
    %446 = vmatpush1.msra.mxu0 0.0
    %447 = vmatprep.subr.mxu0 0.0
    %448 = vmatpush1.msra.mxu0 0.0
    %449 = vmatprep.subr.mxu0 0.0
    %450 = vmatpush1.msra.mxu0 0.0
    %451 = vmatprep.subr.mxu0 0.0
    %452 = vmatpush1.msra.mxu0 0.0
    %453 = vmatprep.subr.mxu0 0.0
    %454 = vmatpush1.msra.mxu0 0.0
    %455 = vmatprep.subr.mxu0 0.0
    %456 = vmatpush1.msra.mxu0 0.0
    %457 = vmatprep.subr.mxu0 0.0
    %458 = vmatpush1.msra.mxu0 0.0
    %459 = vmatprep.subr.mxu0 0.0
    %460 = vmatpush1.msra.mxu0 0.0
    %461 = vmatprep.subr.mxu0 0.0
    %462 = vmatpush1.msra.mxu0 0.0
    %463 = vmatprep.subr.mxu0 0.0
    %464 = vmatpush1.msra.mxu0 0.0
    %465 = vmatprep.subr.mxu0 0.0
    %466 = vmatpush1.msra.mxu0 0.0
    %467 = vmatprep.subr.mxu0 0.0
    %468 = vmatpush1.msra.mxu0 0.0
    %469 = vmatprep.subr.mxu0 0.0
    %470 = vmatpush1.msra.mxu0 0.0
    %471 = vmatprep.subr.mxu0 0.0
    %472 = vmatpush1.msra.mxu0 0.0
    %473 = vmatprep.subr.mxu0 0.0
    %474 = vmatpush1.msra.mxu0 0.0
    %475 = vmatprep.subr.mxu0 0.0
    %476 = vmatpush1.msra.mxu0 0.0
    %477 = vmatprep.mubr.f32.mxu0 0.0
    %478 = vmatmul.mubr.f32.gmra.mrb[0].mxu0 %v411
    %v479 = vpop.f32.mrb[0].mxu0
    %v480 = vadd.f32 %v203, %v479
    %v481 = vpop.f32.mrb[0].mxu0
    %482 = vdwg.mxu0
    %v483 = vadd.f32 %v166, %v480
    %v484 = vxor.u32 %v483, 2147483648
    %v485 = vmul.f32 %v484, 1.442695
    %v486 = vpow.pop %v485
    %v487 = vadd.f32 %v486, 1.0
    %v488 = vrcp.pop %v487
    %v489 = vmul.f32 1.0, %v488
    %491 = vrot.lane.b32.xlu0 %v480, 32
    %v492 = vpop.permute.xlu0 %491
    %v494 = vmul.f32 %v489, %v492
    %496 = vrot.lane.b32.xlu0 %v494, 96
    %v497 = vpop.permute.xlu0 %496
    %v499 = vadd.f32 %v166, %v497
    %v500 = vtanh.pop %v499
    %v501 = vsub.f32 %v409, %v500
    %503 = vrot.lane.b32.xlu0 %v501, 64
    %v504 = vpop.permute.xlu0 %503
    %v506 = vmul.f32 %v489, %v504
    %508 = vrot.lane.b32.xlu0 %v506, 64
    %v509 = vpop.permute.xlu0 %508
    %v511 = vadd.f32 %v500, %v509
    %v513 = vsel %vm64, %v511, 0
    %515 = vmatprep.subr.mxu0 0.0
    %516 = vmatpush1.msra.mxu0 %v194
    %517 = vmatprep.subr.mxu0 0.0
    %518 = vmatpush1.msra.mxu0 %v195
    %519 = vmatprep.subr.mxu0 0.0
    %520 = vmatpush1.msra.mxu0 %v196
    %521 = vmatprep.subr.mxu0 0.0
    %522 = vmatpush1.msra.mxu0 %v197
    %523 = vmatprep.subr.mxu0 0.0
    %524 = vmatpush1.msra.mxu0 0.0
    %525 = vmatprep.subr.mxu0 0.0
    %526 = vmatpush1.msra.mxu0 0.0
    %527 = vmatprep.subr.mxu0 0.0
    %528 = vmatpush1.msra.mxu0 0.0
    %529 = vmatprep.subr.mxu0 0.0
    %530 = vmatpush1.msra.mxu0 0.0
    %531 = vmatprep.subr.mxu0 0.0
    %532 = vmatpush1.msra.mxu0 0.0
    %533 = vmatprep.subr.mxu0 0.0
    %534 = vmatpush1.msra.mxu0 0.0
    %535 = vmatprep.subr.mxu0 0.0
    %536 = vmatpush1.msra.mxu0 0.0
    %537 = vmatprep.subr.mxu0 0.0
    %538 = vmatpush1.msra.mxu0 0.0
    %539 = vmatprep.subr.mxu0 0.0
    %540 = vmatpush1.msra.mxu0 0.0
    %541 = vmatprep.subr.mxu0 0.0
    %542 = vmatpush1.msra.mxu0 0.0
    %543 = vmatprep.subr.mxu0 0.0
    %544 = vmatpush1.msra.mxu0 0.0
    %545 = vmatprep.subr.mxu0 0.0
    %546 = vmatpush1.msra.mxu0 0.0
    %547 = vmatprep.subr.mxu0 0.0
    %548 = vmatpush1.msra.mxu0 0.0
    %549 = vmatprep.subr.mxu0 0.0
    %550 = vmatpush1.msra.mxu0 0.0
    %551 = vmatprep.subr.mxu0 0.0
    %552 = vmatpush1.msra.mxu0 0.0
    %553 = vmatprep.subr.mxu0 0.0
    %554 = vmatpush1.msra.mxu0 0.0
    %555 = vmatprep.subr.mxu0 0.0
    %556 = vmatpush1.msra.mxu0 0.0
    %557 = vmatprep.subr.mxu0 0.0
    %558 = vmatpush1.msra.mxu0 0.0
    %559 = vmatprep.subr.mxu0 0.0
    %560 = vmatpush1.msra.mxu0 0.0
    %561 = vmatprep.subr.mxu0 0.0
    %562 = vmatpush1.msra.mxu0 0.0
    %563 = vmatprep.subr.mxu0 0.0
    %564 = vmatpush1.msra.mxu0 0.0
    %565 = vmatprep.subr.mxu0 0.0
    %566 = vmatpush1.msra.mxu0 0.0
    %567 = vmatprep.subr.mxu0 0.0
    %568 = vmatpush1.msra.mxu0 0.0
    %569 = vmatprep.subr.mxu0 0.0
    %570 = vmatpush1.msra.mxu0 0.0
    %571 = vmatprep.subr.mxu0 0.0
    %572 = vmatpush1.msra.mxu0 0.0
    %573 = vmatprep.subr.mxu0 0.0
    %574 = vmatpush1.msra.mxu0 0.0
    %575 = vmatprep.subr.mxu0 0.0
    %576 = vmatpush1.msra.mxu0 0.0
    %577 = vmatprep.subr.mxu0 0.0
    %578 = vmatpush1.msra.mxu0 0.0
    %579 = vmatprep.mubr.f32.mxu0 0.0
    %580 = vmatmul.mubr.f32.gmra.mrb[0].mxu0 %v513
    %v581 = vpop.f32.mrb[0].mxu0
    %v582 = vadd.f32 %v203, %v581
    %v583 = vpop.f32.mrb[0].mxu0
    %584 = vdwg.mxu0
    %v585 = vadd.f32 %v171, %v582
    %v586 = vxor.u32 %v585, 2147483648
    %v587 = vmul.f32 %v586, 1.442695
    %v588 = vpow.pop %v587
    %v589 = vadd.f32 %v588, 1.0
    %v590 = vrcp.pop %v589
    %v591 = vmul.f32 1.0, %v590
    %593 = vrot.lane.b32.xlu0 %v582, 32
    %v594 = vpop.permute.xlu0 %593
    %v596 = vmul.f32 %v591, %v594
    %598 = vrot.lane.b32.xlu0 %v596, 96
    %v599 = vpop.permute.xlu0 %598
    %v601 = vadd.f32 %v171, %v599
    %v602 = vtanh.pop %v601
    %v603 = vsub.f32 %v511, %v602
    %605 = vrot.lane.b32.xlu0 %v603, 64
    %v606 = vpop.permute.xlu0 %605
    %v608 = vmul.f32 %v591, %v606
    %610 = vrot.lane.b32.xlu0 %v608, 64
    %v611 = vpop.permute.xlu0 %610
    %v613 = vadd.f32 %v602, %v611
    %v615 = vsel %vm64, %v613, 0
    %617 = vmatprep.subr.mxu0 0.0
    %618 = vmatpush1.msra.mxu0 %v194
    %619 = vmatprep.subr.mxu0 0.0
    %620 = vmatpush1.msra.mxu0 %v195
    %621 = vmatprep.subr.mxu0 0.0
    %622 = vmatpush1.msra.mxu0 %v196
    %623 = vmatprep.subr.mxu0 0.0
    %624 = vmatpush1.msra.mxu0 %v197
    %625 = vmatprep.subr.mxu0 0.0
    %626 = vmatpush1.msra.mxu0 0.0
    %627 = vmatprep.subr.mxu0 0.0
    %628 = vmatpush1.msra.mxu0 0.0
    %629 = vmatprep.subr.mxu0 0.0
    %630 = vmatpush1.msra.mxu0 0.0
    %631 = vmatprep.subr.mxu0 0.0
    %632 = vmatpush1.msra.mxu0 0.0
    %633 = vmatprep.subr.mxu0 0.0
    %634 = vmatpush1.msra.mxu0 0.0
    %635 = vmatprep.subr.mxu0 0.0
    %636 = vmatpush1.msra.mxu0 0.0
    %637 = vmatprep.subr.mxu0 0.0
    %638 = vmatpush1.msra.mxu0 0.0
    %639 = vmatprep.subr.mxu0 0.0
    %640 = vmatpush1.msra.mxu0 0.0
    %641 = vmatprep.subr.mxu0 0.0
    %642 = vmatpush1.msra.mxu0 0.0
    %643 = vmatprep.subr.mxu0 0.0
    %644 = vmatpush1.msra.mxu0 0.0
    %645 = vmatprep.subr.mxu0 0.0
    %646 = vmatpush1.msra.mxu0 0.0
    %647 = vmatprep.subr.mxu0 0.0
    %648 = vmatpush1.msra.mxu0 0.0
    %649 = vmatprep.subr.mxu0 0.0
    %650 = vmatpush1.msra.mxu0 0.0
    %651 = vmatprep.subr.mxu0 0.0
    %652 = vmatpush1.msra.mxu0 0.0
    %653 = vmatprep.subr.mxu0 0.0
    %654 = vmatpush1.msra.mxu0 0.0
    %655 = vmatprep.subr.mxu0 0.0
    %656 = vmatpush1.msra.mxu0 0.0
    %657 = vmatprep.subr.mxu0 0.0
    %658 = vmatpush1.msra.mxu0 0.0
    %659 = vmatprep.subr.mxu0 0.0
    %660 = vmatpush1.msra.mxu0 0.0
    %661 = vmatprep.subr.mxu0 0.0
    %662 = vmatpush1.msra.mxu0 0.0
    %663 = vmatprep.subr.mxu0 0.0
    %664 = vmatpush1.msra.mxu0 0.0
    %665 = vmatprep.subr.mxu0 0.0
    %666 = vmatpush1.msra.mxu0 0.0
    %667 = vmatprep.subr.mxu0 0.0
    %668 = vmatpush1.msra.mxu0 0.0
    %669 = vmatprep.subr.mxu0 0.0
    %670 = vmatpush1.msra.mxu0 0.0
    %671 = vmatprep.subr.mxu0 0.0
    %672 = vmatpush1.msra.mxu0 0.0
    %673 = vmatprep.subr.mxu0 0.0
    %674 = vmatpush1.msra.mxu0 0.0
    %675 = vmatprep.subr.mxu0 0.0
    %676 = vmatpush1.msra.mxu0 0.0
    %677 = vmatprep.subr.mxu0 0.0
    %678 = vmatpush1.msra.mxu0 0.0
    %679 = vmatprep.subr.mxu0 0.0
    %680 = vmatpush1.msra.mxu0 0.0
    %681 = vmatprep.mubr.f32.mxu0 0.0
    %682 = vmatmul.mubr.f32.gmra.mrb[0].mxu0 %v615
    %v683 = vpop.f32.mrb[0].mxu0
    %v684 = vadd.f32 %v203, %v683
    %v685 = vpop.f32.mrb[0].mxu0
    %686 = vdwg.mxu0
    %v687 = vadd.f32 %v176, %v684
    %v688 = vxor.u32 %v687, 2147483648
    %v689 = vmul.f32 %v688, 1.442695
    %v690 = vpow.pop %v689
    %v691 = vadd.f32 %v690, 1.0
    %v692 = vrcp.pop %v691
    %v693 = vmul.f32 1.0, %v692
    %695 = vrot.lane.b32.xlu0 %v684, 32
    %v696 = vpop.permute.xlu0 %695
    %v698 = vmul.f32 %v693, %v696
    %700 = vrot.lane.b32.xlu0 %v698, 96
    %v701 = vpop.permute.xlu0 %700
    %v703 = vadd.f32 %v176, %v701
    %v704 = vtanh.pop %v703
    %v705 = vsub.f32 %v613, %v704
    %707 = vrot.lane.b32.xlu0 %v705, 64
    %v708 = vpop.permute.xlu0 %707
    %v710 = vmul.f32 %v693, %v708
    %712 = vrot.lane.b32.xlu0 %v710, 64
    %v713 = vpop.permute.xlu0 %712
    %v715 = vadd.f32 %v704, %v713
    %v717 = vsel %vm64, %v715, 0
    %719 = vmatprep.subr.mxu0 0.0
    %720 = vmatpush1.msra.mxu0 %v194
    %721 = vmatprep.subr.mxu0 0.0
    %722 = vmatpush1.msra.mxu0 %v195
    %723 = vmatprep.subr.mxu0 0.0
    %724 = vmatpush1.msra.mxu0 %v196
    %725 = vmatprep.subr.mxu0 0.0
    %726 = vmatpush1.msra.mxu0 %v197
    %727 = vmatprep.subr.mxu0 0.0
    %728 = vmatpush1.msra.mxu0 0.0
    %729 = vmatprep.subr.mxu0 0.0
    %730 = vmatpush1.msra.mxu0 0.0
    %731 = vmatprep.subr.mxu0 0.0
    %732 = vmatpush1.msra.mxu0 0.0
    %733 = vmatprep.subr.mxu0 0.0
    %734 = vmatpush1.msra.mxu0 0.0
    %735 = vmatprep.subr.mxu0 0.0
    %736 = vmatpush1.msra.mxu0 0.0
    %737 = vmatprep.subr.mxu0 0.0
    %738 = vmatpush1.msra.mxu0 0.0
    %739 = vmatprep.subr.mxu0 0.0
    %740 = vmatpush1.msra.mxu0 0.0
    %741 = vmatprep.subr.mxu0 0.0
    %742 = vmatpush1.msra.mxu0 0.0
    %743 = vmatprep.subr.mxu0 0.0
    %744 = vmatpush1.msra.mxu0 0.0
    %745 = vmatprep.subr.mxu0 0.0
    %746 = vmatpush1.msra.mxu0 0.0
    %747 = vmatprep.subr.mxu0 0.0
    %748 = vmatpush1.msra.mxu0 0.0
    %749 = vmatprep.subr.mxu0 0.0
    %750 = vmatpush1.msra.mxu0 0.0
    %751 = vmatprep.subr.mxu0 0.0
    %752 = vmatpush1.msra.mxu0 0.0
    %753 = vmatprep.subr.mxu0 0.0
    %754 = vmatpush1.msra.mxu0 0.0
    %755 = vmatprep.subr.mxu0 0.0
    %756 = vmatpush1.msra.mxu0 0.0
    %757 = vmatprep.subr.mxu0 0.0
    %758 = vmatpush1.msra.mxu0 0.0
    %759 = vmatprep.subr.mxu0 0.0
    %760 = vmatpush1.msra.mxu0 0.0
    %761 = vmatprep.subr.mxu0 0.0
    %762 = vmatpush1.msra.mxu0 0.0
    %763 = vmatprep.subr.mxu0 0.0
    %764 = vmatpush1.msra.mxu0 0.0
    %765 = vmatprep.subr.mxu0 0.0
    %766 = vmatpush1.msra.mxu0 0.0
    %767 = vmatprep.subr.mxu0 0.0
    %768 = vmatpush1.msra.mxu0 0.0
    %769 = vmatprep.subr.mxu0 0.0
    %770 = vmatpush1.msra.mxu0 0.0
    %771 = vmatprep.subr.mxu0 0.0
    %772 = vmatpush1.msra.mxu0 0.0
    %773 = vmatprep.subr.mxu0 0.0
    %774 = vmatpush1.msra.mxu0 0.0
    %775 = vmatprep.subr.mxu0 0.0
    %776 = vmatpush1.msra.mxu0 0.0
    %777 = vmatprep.subr.mxu0 0.0
    %778 = vmatpush1.msra.mxu0 0.0
    %779 = vmatprep.subr.mxu0 0.0
    %780 = vmatpush1.msra.mxu0 0.0
    %781 = vmatprep.subr.mxu0 0.0
    %782 = vmatpush1.msra.mxu0 0.0
    %783 = vmatprep.mubr.f32.mxu0 0.0
    %784 = vmatmul.mubr.f32.gmra.mrb[0].mxu0 %v717
    %v785 = vpop.f32.mrb[0].mxu0
    %v786 = vadd.f32 %v203, %v785
    %v787 = vpop.f32.mrb[0].mxu0
    %788 = vdwg.mxu0
    %v789 = vadd.f32 %v181, %v786
    %v790 = vxor.u32 %v789, 2147483648
    %v791 = vmul.f32 %v790, 1.442695
    %v792 = vpow.pop %v791
    %v793 = vadd.f32 %v792, 1.0
    %v794 = vrcp.pop %v793
    %v795 = vmul.f32 1.0, %v794
    %797 = vrot.lane.b32.xlu0 %v786, 32
    %v798 = vpop.permute.xlu0 %797
    %v800 = vmul.f32 %v795, %v798
    %802 = vrot.lane.b32.xlu0 %v800, 96
    %v803 = vpop.permute.xlu0 %802
    %v805 = vadd.f32 %v181, %v803
    %v806 = vtanh.pop %v805
    %v807 = vsub.f32 %v715, %v806
    %809 = vrot.lane.b32.xlu0 %v807, 64
    %v810 = vpop.permute.xlu0 %809
    %v812 = vmul.f32 %v795, %v810
    %814 = vrot.lane.b32.xlu0 %v812, 64
    %v815 = vpop.permute.xlu0 %814
    %v817 = vadd.f32 %v806, %v815
    %v819 = vsel %vm64, %v817, 0
    %821 = vmatprep.subr.mxu0 0.0
    %822 = vmatpush1.msra.mxu0 %v194
    %823 = vmatprep.subr.mxu0 0.0
    %824 = vmatpush1.msra.mxu0 %v195
    %825 = vmatprep.subr.mxu0 0.0
    %826 = vmatpush1.msra.mxu0 %v196
    %827 = vmatprep.subr.mxu0 0.0
    %828 = vmatpush1.msra.mxu0 %v197
    %829 = vmatprep.subr.mxu0 0.0
    %830 = vmatpush1.msra.mxu0 0.0
    %831 = vmatprep.subr.mxu0 0.0
    %832 = vmatpush1.msra.mxu0 0.0
    %833 = vmatprep.subr.mxu0 0.0
    %834 = vmatpush1.msra.mxu0 0.0
    %835 = vmatprep.subr.mxu0 0.0
    %836 = vmatpush1.msra.mxu0 0.0
    %837 = vmatprep.subr.mxu0 0.0
    %838 = vmatpush1.msra.mxu0 0.0
    %839 = vmatprep.subr.mxu0 0.0
    %840 = vmatpush1.msra.mxu0 0.0
    %841 = vmatprep.subr.mxu0 0.0
    %842 = vmatpush1.msra.mxu0 0.0
    %843 = vmatprep.subr.mxu0 0.0
    %844 = vmatpush1.msra.mxu0 0.0
    %845 = vmatprep.subr.mxu0 0.0
    %846 = vmatpush1.msra.mxu0 0.0
    %847 = vmatprep.subr.mxu0 0.0
    %848 = vmatpush1.msra.mxu0 0.0
    %849 = vmatprep.subr.mxu0 0.0
    %850 = vmatpush1.msra.mxu0 0.0
    %851 = vmatprep.subr.mxu0 0.0
    %852 = vmatpush1.msra.mxu0 0.0
    %853 = vmatprep.subr.mxu0 0.0
    %854 = vmatpush1.msra.mxu0 0.0
    %855 = vmatprep.subr.mxu0 0.0
    %856 = vmatpush1.msra.mxu0 0.0
    %857 = vmatprep.subr.mxu0 0.0
    %858 = vmatpush1.msra.mxu0 0.0
    %859 = vmatprep.subr.mxu0 0.0
    %860 = vmatpush1.msra.mxu0 0.0
    %861 = vmatprep.subr.mxu0 0.0
    %862 = vmatpush1.msra.mxu0 0.0
    %863 = vmatprep.subr.mxu0 0.0
    %864 = vmatpush1.msra.mxu0 0.0
    %865 = vmatprep.subr.mxu0 0.0
    %866 = vmatpush1.msra.mxu0 0.0
    %867 = vmatprep.subr.mxu0 0.0
    %868 = vmatpush1.msra.mxu0 0.0
    %869 = vmatprep.subr.mxu0 0.0
    %870 = vmatpush1.msra.mxu0 0.0
    %871 = vmatprep.subr.mxu0 0.0
    %872 = vmatpush1.msra.mxu0 0.0
    %873 = vmatprep.subr.mxu0 0.0
    %874 = vmatpush1.msra.mxu0 0.0
    %875 = vmatprep.subr.mxu0 0.0
    %876 = vmatpush1.msra.mxu0 0.0
    %877 = vmatprep.subr.mxu0 0.0
    %878 = vmatpush1.msra.mxu0 0.0
    %879 = vmatprep.subr.mxu0 0.0
    %880 = vmatpush1.msra.mxu0 0.0
    %881 = vmatprep.subr.mxu0 0.0
    %882 = vmatpush1.msra.mxu0 0.0
    %883 = vmatprep.subr.mxu0 0.0
    %884 = vmatpush1.msra.mxu0 0.0
    %885 = vmatprep.mubr.f32.mxu0 0.0
    %886 = vmatmul.mubr.f32.gmra.mrb[0].mxu0 %v819
    %v887 = vpop.f32.mrb[0].mxu0
    %v888 = vadd.f32 %v203, %v887
    %v889 = vpop.f32.mrb[0].mxu0
    %890 = vdwg.mxu0
    %v891 = vadd.f32 %v186, %v888
    %v892 = vxor.u32 %v891, 2147483648
    %v893 = vmul.f32 %v892, 1.442695
    %v894 = vpow.pop %v893
    %v895 = vadd.f32 %v894, 1.0
    %v896 = vrcp.pop %v895
    %v897 = vmul.f32 1.0, %v896
    %899 = vrot.lane.b32.xlu0 %v888, 32
    %v900 = vpop.permute.xlu0 %899
    %v902 = vmul.f32 %v897, %v900
    %904 = vrot.lane.b32.xlu0 %v902, 96
    %v905 = vpop.permute.xlu0 %904
    %v907 = vadd.f32 %v186, %v905
    %v908 = vtanh.pop %v907
    %v909 = vsub.f32 %v817, %v908
    %911 = vrot.lane.b32.xlu0 %v909, 64
    %v912 = vpop.permute.xlu0 %911
    %v914 = vmul.f32 %v897, %v912
    %916 = vrot.lane.b32.xlu0 %v914, 64
    %v917 = vpop.permute.xlu0 %916
    %v919 = vadd.f32 %v908, %v917
    %v921 = vsel %vm64, %v919, 0
    %923 = vmatprep.subr.mxu0 0.0
    %924 = vmatpush1.msra.mxu0 %v194
    %925 = vmatprep.subr.mxu0 0.0
    %926 = vmatpush1.msra.mxu0 %v195
    %927 = vmatprep.subr.mxu0 0.0
    %928 = vmatpush1.msra.mxu0 %v196
    %929 = vmatprep.subr.mxu0 0.0
    %930 = vmatpush1.msra.mxu0 %v197
    %931 = vmatprep.subr.mxu0 0.0
    %932 = vmatpush1.msra.mxu0 0.0
    %933 = vmatprep.subr.mxu0 0.0
    %934 = vmatpush1.msra.mxu0 0.0
    %935 = vmatprep.subr.mxu0 0.0
    %936 = vmatpush1.msra.mxu0 0.0
    %937 = vmatprep.subr.mxu0 0.0
    %938 = vmatpush1.msra.mxu0 0.0
    %939 = vmatprep.subr.mxu0 0.0
    %940 = vmatpush1.msra.mxu0 0.0
    %941 = vmatprep.subr.mxu0 0.0
    %942 = vmatpush1.msra.mxu0 0.0
    %943 = vmatprep.subr.mxu0 0.0
    %944 = vmatpush1.msra.mxu0 0.0
    %945 = vmatprep.subr.mxu0 0.0
    %946 = vmatpush1.msra.mxu0 0.0
    %947 = vmatprep.subr.mxu0 0.0
    %948 = vmatpush1.msra.mxu0 0.0
    %949 = vmatprep.subr.mxu0 0.0
    %950 = vmatpush1.msra.mxu0 0.0
    %951 = vmatprep.subr.mxu0 0.0
    %952 = vmatpush1.msra.mxu0 0.0
    %953 = vmatprep.subr.mxu0 0.0
    %954 = vmatpush1.msra.mxu0 0.0
    %955 = vmatprep.subr.mxu0 0.0
    %956 = vmatpush1.msra.mxu0 0.0
    %957 = vmatprep.subr.mxu0 0.0
    %958 = vmatpush1.msra.mxu0 0.0
    %959 = vmatprep.subr.mxu0 0.0
    %960 = vmatpush1.msra.mxu0 0.0
    %961 = vmatprep.subr.mxu0 0.0
    %962 = vmatpush1.msra.mxu0 0.0
    %963 = vmatprep.subr.mxu0 0.0
    %964 = vmatpush1.msra.mxu0 0.0
    %965 = vmatprep.subr.mxu0 0.0
    %966 = vmatpush1.msra.mxu0 0.0
    %967 = vmatprep.subr.mxu0 0.0
    %968 = vmatpush1.msra.mxu0 0.0
    %969 = vmatprep.subr.mxu0 0.0
    %970 = vmatpush1.msra.mxu0 0.0
    %971 = vmatprep.subr.mxu0 0.0
    %972 = vmatpush1.msra.mxu0 0.0
    %973 = vmatprep.subr.mxu0 0.0
    %974 = vmatpush1.msra.mxu0 0.0
    %975 = vmatprep.subr.mxu0 0.0
    %976 = vmatpush1.msra.mxu0 0.0
    %977 = vmatprep.subr.mxu0 0.0
    %978 = vmatpush1.msra.mxu0 0.0
    %979 = vmatprep.subr.mxu0 0.0
    %980 = vmatpush1.msra.mxu0 0.0
    %981 = vmatprep.subr.mxu0 0.0
    %982 = vmatpush1.msra.mxu0 0.0
    %983 = vmatprep.subr.mxu0 0.0
    %984 = vmatpush1.msra.mxu0 0.0
    %985 = vmatprep.subr.mxu0 0.0
    %986 = vmatpush1.msra.mxu0 0.0
    %987 = vmatprep.mubr.f32.mxu0 0.0
    %988 = vmatmul.mubr.f32.gmra.mrb[0].mxu0 %v921
    %v989 = vpop.f32.mrb[0].mxu0
    %v990 = vadd.f32 %v203, %v989
    %v991 = vpop.f32.mrb[0].mxu0
    %992 = vdwg.mxu0
    %v993 = vadd.f32 %v191, %v990
    %v994 = vxor.u32 %v993, 2147483648
    %v995 = vmul.f32 %v994, 1.442695
    %v996 = vpow.pop %v995
    %v997 = vadd.f32 %v996, 1.0
    %v998 = vrcp.pop %v997
    %v999 = vmul.f32 1.0, %v998
    %1001 = vrot.lane.b32.xlu0 %v990, 32
    %v1002 = vpop.permute.xlu0 %1001
    %v1004 = vmul.f32 %v999, %v1002
    %1006 = vrot.lane.b32.xlu0 %v1004, 96
    %v1007 = vpop.permute.xlu0 %1006
    %v1009 = vadd.f32 %v191, %v1007
    %v1010 = vtanh.pop %v1009
    %v1011 = vsub.f32 %v919, %v1010
    %1013 = vrot.lane.b32.xlu0 %v1011, 64
    %v1014 = vpop.permute.xlu0 %1013
    %v1016 = vmul.f32 %v999, %v1014
    %1018 = vrot.lane.b32.xlu0 %v1016, 64
    %v1019 = vpop.permute.xlu0 %1018
    %v1021 = vadd.f32 %v1010, %v1019
    %v1022 = vld [vmem:[%s6] sm:$0xff]
    %v1023 = vld [vmem:[%s6 + $0x8] sm:$0xff]
    %v1024 = vld [vmem:[%s6 + $0x10] sm:$0xff]
    %v1025 = vld [vmem:[%s6 + $0x18] sm:$0xff]
    %v1026 = vld [vmem:[%s7] sm:$0x1]
    %v1028 = vlaneseq
    %v1029 = vshrl.u32 %v1028, 7
    %v1030 = vsub.s32 0, %v1029
    %v1031 = vrot.slane %v1026, %v1030
    %v1034 = vsel %vm64, %v1021, 0
    %1036 = vmatprep.subr.mxu0 0.0
    %1037 = vmatpush1.msra.mxu0 %v1022
    %1038 = vmatprep.subr.mxu0 0.0
    %1039 = vmatpush1.msra.mxu0 %v1023
    %1040 = vmatprep.subr.mxu0 0.0
    %1041 = vmatpush1.msra.mxu0 %v1024
    %1042 = vmatprep.subr.mxu0 0.0
    %1043 = vmatpush1.msra.mxu0 %v1025
    %1044 = vmatprep.subr.mxu0 0.0
    %1045 = vmatpush1.msra.mxu0 0.0
    %1046 = vmatprep.subr.mxu0 0.0
    %1047 = vmatpush1.msra.mxu0 0.0
    %1048 = vmatprep.subr.mxu0 0.0
    %1049 = vmatpush1.msra.mxu0 0.0
    %1050 = vmatprep.subr.mxu0 0.0
    %1051 = vmatpush1.msra.mxu0 0.0
    %1052 = vmatprep.subr.mxu0 0.0
    %1053 = vmatpush1.msra.mxu0 0.0
    %1054 = vmatprep.subr.mxu0 0.0
    %1055 = vmatpush1.msra.mxu0 0.0
    %1056 = vmatprep.subr.mxu0 0.0
    %1057 = vmatpush1.msra.mxu0 0.0
    %1058 = vmatprep.subr.mxu0 0.0
    %1059 = vmatpush1.msra.mxu0 0.0
    %1060 = vmatprep.subr.mxu0 0.0
    %1061 = vmatpush1.msra.mxu0 0.0
    %1062 = vmatprep.subr.mxu0 0.0
    %1063 = vmatpush1.msra.mxu0 0.0
    %1064 = vmatprep.subr.mxu0 0.0
    %1065 = vmatpush1.msra.mxu0 0.0
    %1066 = vmatprep.subr.mxu0 0.0
    %1067 = vmatpush1.msra.mxu0 0.0
    %1068 = vmatprep.subr.mxu0 0.0
    %1069 = vmatpush1.msra.mxu0 0.0
    %1070 = vmatprep.subr.mxu0 0.0
    %1071 = vmatpush1.msra.mxu0 0.0
    %1072 = vmatprep.subr.mxu0 0.0
    %1073 = vmatpush1.msra.mxu0 0.0
    %1074 = vmatprep.subr.mxu0 0.0
    %1075 = vmatpush1.msra.mxu0 0.0
    %1076 = vmatprep.subr.mxu0 0.0
    %1077 = vmatpush1.msra.mxu0 0.0
    %1078 = vmatprep.subr.mxu0 0.0
    %1079 = vmatpush1.msra.mxu0 0.0
    %1080 = vmatprep.subr.mxu0 0.0
    %1081 = vmatpush1.msra.mxu0 0.0
    %1082 = vmatprep.subr.mxu0 0.0
    %1083 = vmatpush1.msra.mxu0 0.0
    %1084 = vmatprep.subr.mxu0 0.0
    %1085 = vmatpush1.msra.mxu0 0.0
    %1086 = vmatprep.subr.mxu0 0.0
    %1087 = vmatpush1.msra.mxu0 0.0
    %1088 = vmatprep.subr.mxu0 0.0
    %1089 = vmatpush1.msra.mxu0 0.0
    %1090 = vmatprep.subr.mxu0 0.0
    %1091 = vmatpush1.msra.mxu0 0.0
    %1092 = vmatprep.subr.mxu0 0.0
    %1093 = vmatpush1.msra.mxu0 0.0
    %1094 = vmatprep.subr.mxu0 0.0
    %1095 = vmatpush1.msra.mxu0 0.0
    %1096 = vmatprep.subr.mxu0 0.0
    %1097 = vmatpush1.msra.mxu0 0.0
    %1098 = vmatprep.subr.mxu0 0.0
    %1099 = vmatpush1.msra.mxu0 0.0
    %1100 = vmatprep.mubr.f32.mxu0 0.0
    %1101 = vmatmul.mubr.f32.gmra.mrb[0].mxu0 %v309
    %v1102 = vpop.f32.mrb[0].mxu0
    %v1103 = vadd.f32 %v1031, %v1102
    %v1104 = vpop.f32.mrb[0].mxu0
    %1105 = vmatprep.mubr.f32.mxu0 0.0
    %1106 = vmatmul.mubr.f32.gmra.mrb[0].mxu0 %v411
    %v1107 = vpop.f32.mrb[0].mxu0
    %v1108 = vadd.f32 %v1031, %v1107
    %v1109 = vpop.f32.mrb[0].mxu0
    %1110 = vmatprep.mubr.f32.mxu0 0.0
    %1111 = vmatmul.mubr.f32.gmra.mrb[0].mxu0 %v513
    %v1112 = vpop.f32.mrb[0].mxu0
    %v1113 = vadd.f32 %v1031, %v1112
    %v1114 = vpop.f32.mrb[0].mxu0
    %1115 = vmatprep.mubr.f32.mxu0 0.0
    %1116 = vmatmul.mubr.f32.gmra.mrb[0].mxu0 %v615
    %v1117 = vpop.f32.mrb[0].mxu0
    %v1118 = vadd.f32 %v1031, %v1117
    %v1119 = vpop.f32.mrb[0].mxu0
    %1120 = vmatprep.mubr.f32.mxu0 0.0
    %1121 = vmatmul.mubr.f32.gmra.mrb[0].mxu0 %v717
    %v1122 = vpop.f32.mrb[0].mxu0
    %v1123 = vadd.f32 %v1031, %v1122
    %v1124 = vpop.f32.mrb[0].mxu0
    %1125 = vmatprep.mubr.f32.mxu0 0.0
    %1126 = vmatmul.mubr.f32.gmra.mrb[0].mxu0 %v819
    %v1127 = vpop.f32.mrb[0].mxu0
    %v1128 = vadd.f32 %v1031, %v1127
    %v1129 = vpop.f32.mrb[0].mxu0
    %1130 = vmatprep.mubr.f32.mxu0 0.0
    %1131 = vmatmul.mubr.f32.gmra.mrb[0].mxu0 %v921
    %v1132 = vpop.f32.mrb[0].mxu0
    %v1133 = vadd.f32 %v1031, %v1132
    %v1134 = vpop.f32.mrb[0].mxu0
    %1135 = vmatprep.mubr.f32.mxu0 0.0
    %1136 = vmatmul.mubr.f32.gmra.mrb[0].mxu0 %v1034
    %v1137 = vpop.f32.mrb[0].mxu0
    %v1138 = vadd.f32 %v1031, %v1137
    %v1139 = vpop.f32.mrb[0].mxu0
    %1140 = vdwg.mxu0
    %1141 = vst [vmem:[#allocation5] sm:$0xff] %v1103
    %1142 = vst [vmem:[#allocation5 + $0x8] sm:$0xff] %v1108
    %1143 = vst [vmem:[#allocation5 + $0x10] sm:$0xff] %v1113
    %1144 = vst [vmem:[#allocation5 + $0x18] sm:$0xff] %v1118
    %1145 = vst [vmem:[#allocation5 + $0x20] sm:$0xff] %v1123
    %1146 = vst [vmem:[#allocation5 + $0x28] sm:$0xff] %v1128
    %1147 = vst [vmem:[#allocation5 + $0x30] sm:$0xff] %v1133
    %1148 = vst [vmem:[#allocation5 + $0x38] sm:$0xff] %v1138
    %1149 = vst.msk [vmem:[#allocation6] sm:$0xff] %vm64, %v1021
    // Predicated region
    $region38: #{tpu_custom_call.1} parent=1 // pred_check
      _
    $region39: #{tpu_custom_call.1} parent=1 // pred_check_branch
      %1151 = sbr.rel (0) target = $region41
    $region40: #{tpu_custom_call.1} parent=1 // pred_region
      %s1153 = ssub.s32 1024, 1024
      %1154 = vsyncadd [#allocation4], %s1153
      %s1155 = sshll.u32 [#allocation5], 4
      %s1156 = int_to_ptr.vmem [resolvable:$true] %s1155
      %1161 = dma.vmem_to_hbm [thread:$0]  %s1156, 1024, %s8, [#allocation4], 128, 128, 8
    $region41: #{tpu_custom_call.1} parent=1 // pred_fallthru
      _
    // Predicated region
    $region42: #{tpu_custom_call.1} parent=1 // pred_check
      _
    $region43: #{tpu_custom_call.1} parent=1 // pred_check_branch
      %1163 = sbr.rel (0) target = $region45
    $region44: #{tpu_custom_call.1} parent=1 // pred_region
      %s1165 = ssub.s32 128, 128
      %1166 = vsyncadd [#allocation7], %s1165
      %s1168 = sshll.u32 [#allocation6], 4
      %s1169 = int_to_ptr.vmem [resolvable:$true] %s1168
      %1171 = dma.vmem_to_hbm [thread:$0]  %s1169, 128, %s9, [#allocation7]
    $region45: #{tpu_custom_call.1} parent=1 // pred_fallthru
      _
    // Predicated region
    $region46: #{tpu_custom_call.1} parent=1 // pred_check
      _
    $region47: #{tpu_custom_call.1} parent=1 // pred_check_branch
      %1173 = sbr.rel (0) target = $region49
    $region48: #{tpu_custom_call.1} parent=1 // pred_region
      %1174 = dma.done [#allocation4], 1024
    $region49: #{tpu_custom_call.1} parent=1 // pred_fallthru
      _
    // Predicated region
    $region50: #{tpu_custom_call.1} parent=1 // pred_check
      _
    $region51: #{tpu_custom_call.1} parent=1 // pred_check_branch
      %1176 = sbr.rel (0) target = $region53
    $region52: #{tpu_custom_call.1} parent=1 // pred_region
      %1177 = dma.done [#allocation7], 128
    $region53: #{tpu_custom_call.1} parent=1 // pred_fallthru
      _
    %1178 = vsyncpa [#allocation3], 1
    %1179 = vsyncpa [#allocation4], 1
    %1180 = vsyncpa [#allocation7], 1

</llo_original>
